<compile_context>
chip_gen: v5e
topology: v5e:2x2
jax: 0.10.0
libtpu: 0.0.40
codegen_flags: <defaults>
</compile_context>

<pallas_src>
import functools

import jax
import jax.numpy as jnp
from jax import lax
from jax.experimental import pallas as pl
from jax.experimental.pallas import tpu as pltpu


def _supcon_tile_kernel(feat_ref, lcol_ref, lrow_ref, out_ref, *,
                        inv_temp: float, tile_b: int, num_valid: int):
    """One tile_b-row anchor tile vs. the full (resident) contrast set."""
    i = pl.program_id(0)
    row0 = i * tile_b

    fb = feat_ref[...]                                              # (Bp, D)
    fa = feat_ref[pl.ds(pl.multiple_of(row0, tile_b), tile_b), :]   # (Tb, D)
    la = lcol_ref[...]                                              # (Tb, 1) i32
    lb = lrow_ref[...]                                              # (1, Bp) i32

    # Fold 1/temperature into the small anchor operand; skip when it's 1.
    if inv_temp != 1.0:
        fa = fa * inv_temp

    # anchor_dot_contrast: contract D of both operands on the MXU (f32 acc),
    # no transpose of the contrast matrix.
    adc = lax.dot_general(fa, fb,
                          dimension_numbers=(((1,), (1,)), ((), ())),
                          preferred_element_type=jnp.float32)       # (Tb, Bp)

    # Numerically stable shift. Padded columns never exceed the diagonal
    # (inv_temp * ||f||^2 > 0 >= 0-dot), so the max matches the reference.
    row_max = jnp.max(adc, axis=1, keepdims=True)                   # (Tb, 1)
    logits = adc - row_max                                          # (Tb, Bp)

    # Fused diagonal + padded-column invalidity mask.
    r_ids = lax.broadcasted_iota(jnp.int32, adc.shape, 0) + row0
    c_ids = lax.broadcasted_iota(jnp.int32, adc.shape, 1)
    invalid = r_ids == c_ids
    if num_valid < adc.shape[1]:
        invalid = jnp.logical_or(invalid, c_ids >= num_valid)

    pos_mask = jnp.where(invalid, 0.0, (la == lb).astype(jnp.float32))  # (Tb, Bp)
    exp_logits = jnp.where(invalid, 0.0, jnp.exp(logits))               # (Tb, Bp)

    # Contrast-axis reductions as (1,Bp)x(Tb,Bp)->(1,Tb) MXU mat-vecs:
    # keeps the sums off the XLU and produces lane-dense per-anchor results
    # that feed an unmasked lane-dense output store.
    ones_row = jnp.ones((1, adc.shape[1]), jnp.float32)
    dn = (((1,), (1,)), ((), ()))
    mask_sum = lax.dot_general(ones_row, pos_mask, dn,
                               preferred_element_type=jnp.float32)          # (1, Tb)
    exp_sum = lax.dot_general(ones_row, exp_logits, dn,
                              preferred_element_type=jnp.float32)           # (1, Tb)
    masked_logit_sum = lax.dot_general(ones_row, pos_mask * logits, dn,
                                       preferred_element_type=jnp.float32)  # (1, Tb)

    single = (mask_sum == 0.0).astype(jnp.float32)                          # (1, Tb)
    log_denom = jnp.log(exp_sum)
    # sum(mask*(logits - log_denom)) == sum(mask*logits) - mask_sum*log_denom
    mean_log_prob_pos = (masked_logit_sum - mask_sum * log_denom) * pl.reciprocal(
        mask_sum + single, approx=False)
    loss = -mean_log_prob_pos * (1.0 - single)                              # (1, Tb)

    out_ref[...] = jnp.concatenate([loss, single], axis=0)                  # (2, Tb)


def _round_up(x: int, m: int) -> int:
    return (x + m - 1) // m * m


def _vmem_capacity_bytes() -> int:
    try:
        cap = getattr(pltpu.get_tpu_info(), "vmem_capacity_bytes", None)
        if cap:
            return int(cap)
    except Exception:
        pass
    return 64 * 1024 * 1024  # conservative: v7x per-TensorCore VMEM


def _supports_buffered() -> bool:
    try:
        pl.BlockSpec((8, 128), lambda i: (0, 0), pipeline_mode=pl.Buffered(1))
        return True
    except Exception:
        return False


def _resident_spec(shape, single_buffer: bool) -> pl.BlockSpec:
    """BlockSpec for a grid-invariant (resident) input; single-buffered if possible."""
    index_map = lambda i: (0,) * len(shape)
    if single_buffer:
        return pl.BlockSpec(shape, index_map, pipeline_mode=pl.Buffered(1))
    return pl.BlockSpec(shape, index_map)


def _estimate_vmem(tile_b: int, b_pad: int, d: int, elt: int, feat_bufs: int) -> int:
    return (feat_bufs * b_pad * d * elt       # resident feature matrix
            + feat_bufs * 8 * b_pad * 4       # labels row (sublane-padded to 8)
            + 2 * tile_b * 128 * 4            # labels column tile (lane-padded)
            + 2 * 8 * tile_b * 4              # (2, Tb) output tile (sublane-padded)
            + 7 * tile_b * b_pad * 4)         # in-kernel (Tb, Bp) f32 temporaries


def _plan_tiling(b: int, d: int, elt: int, vmem_cap: int, feat_bufs: int):
    budget = int(vmem_cap * 0.70)             # ~30% headroom for compiler scratch
    if b > 128:
        # Prefer >= 2 anchor tiles so the grid can split across TensorCores (v7x);
        # on v5e/v6e parallel-vs-arbitrary is a measured no-op, so this is harmless.
        max_tb = min(512, max(128, ((_round_up(b, 128) // 2) // 128) * 128))
    else:
        max_tb = 128
    for tb in (512, 384, 256, 128):
        if tb > max_tb:
            continue
        bp = _round_up(b, tb)
        est = _estimate_vmem(tb, bp, d, elt, feat_bufs)
        if est <= budget:
            return tb, bp, est
    # TODO(synk): when even tile_b=128 overflows the budget (huge B), tile the
    #             contrast axis with a flash-style online log-sum-exp.
    tb = 128
    bp = _round_up(b, tb)
    return tb, bp, _estimate_vmem(tb, bp, d, elt, feat_bufs)


def supcon_loss_clear(features: jax.Array, labels: jax.Array,
                      temperature: float = 1.0, *,
                      use_bf16: bool = True) -> jax.Array:
    """SupConLoss_clear forward.  features: [B, D] float, labels: [B] int."""
    B, D = features.shape
    labels = labels.reshape(-1).astype(jnp.int32)
    inv_temp = 1.0 / float(temperature)

    feats = features.astype(jnp.float32)
    comp_dtype = jnp.bfloat16 if use_bf16 else jnp.float32
    elt = 2 if use_bf16 else 4

    vmem_cap = _vmem_capacity_bytes()
    single_buffer = _supports_buffered()
    feat_bufs = 1 if single_buffer else 2
    tile_b, B_pad, est = _plan_tiling(B, D, elt, vmem_cap, feat_bufs)
    num_tiles = B_pad // tile_b

    # Pad ragged batches with masked rows/columns (excluded via num_valid).
    if B_pad != B:
        feats = jnp.pad(feats, ((0, B_pad - B), (0, 0)))
        labels = jnp.pad(labels, (0, B_pad - B))
    comp = feats.astype(comp_dtype)
    labels_col = labels.reshape(B_pad, 1)
    labels_row = labels.reshape(1, B_pad)

    vmem_limit = int(min(max(int(est * 1.25), 32 * 1024 * 1024),
                         int(vmem_cap * 0.9)))

    kernel = functools.partial(_supcon_tile_kernel, inv_temp=inv_temp,
                               tile_b=tile_b, num_valid=B)

    out = pl.pallas_call(
        kernel,
        out_shape=jax.ShapeDtypeStruct((2, B_pad), jnp.float32),
        grid=(num_tiles,),
        in_specs=[
            _resident_spec((B_pad, D), single_buffer),     # features (resident)
            pl.BlockSpec((tile_b, 1), lambda i: (i, 0)),   # anchor labels (column)
            _resident_spec((1, B_pad), single_buffer),     # all labels (lane-dense)
        ],
        out_specs=pl.BlockSpec((2, tile_b), lambda i: (0, i)),
        compiler_params=pltpu.CompilerParams(
            dimension_semantics=("parallel",),
            vmem_limit_bytes=vmem_limit),
    )(comp, labels_col, labels_row)

    # Tiny O(B) finalization (matches reference: loss.sum() / (B - #singletons)).
    loss_vec = out[0, :B]
    single_vec = out[1, :B]
    return jnp.sum(loss_vec) / (jnp.float32(B) - jnp.sum(single_vec))


def _reference(features, labels, temperature=1.0):
    # Pure-JAX reference mirroring the PyTorch module.
    B = features.shape[0]
    labels = labels.reshape(-1, 1)
    mask = (labels == labels.T).astype(jnp.float32)
    adc = (features @ features.T) / temperature
    logits = adc - jnp.max(adc, axis=1, keepdims=True)
    logits_mask = 1.0 - jnp.eye(B, dtype=jnp.float32)
    mask = mask * logits_mask
    single = (mask.sum(1) == 0).astype(jnp.float32)
    exp_logits = jnp.exp(logits) * logits_mask
    log_prob = logits - jnp.log(exp_logits.sum(1, keepdims=True))
    mean_log_prob_pos = (mask * log_prob).sum(1) / (mask.sum(1) + single)
    loss = -mean_log_prob_pos * (1 - single)
    return loss.sum() / (B - single.sum())


if __name__ == "__main__":
    key = jax.random.PRNGKey(0)
    kf, kl = jax.random.split(key)
    B, D = 8, 32
    features = jax.random.normal(kf, (B, D), dtype=jnp.float32)
    # L2-normalize like typical SupCon usage (well-conditioned, not required).
    features = features / jnp.linalg.norm(features, axis=1, keepdims=True)
    labels = jax.random.randint(kl, (B,), 0, 3)

    ref = _reference(features, labels, temperature=1.0)

    # Exact f32-MXU path: tight tolerance vs the PyTorch-equivalent reference.
    loss_f32 = supcon_loss_clear(features, labels, temperature=1.0, use_bf16=False)
    jax.block_until_ready(loss_f32)
    assert jnp.allclose(loss_f32, ref, atol=1e-4, rtol=1e-4), (loss_f32, ref)

    # Default fast path (bf16 operands, f32 MXU accumulation): looser tolerance.
    loss_bf16 = supcon_loss_clear(features, labels, temperature=1.0)
    jax.block_until_ready(loss_bf16)
    assert jnp.allclose(loss_bf16, ref, atol=5e-2, rtol=5e-2), (loss_bf16, ref)

    # Non-unit temperature exercises the in-kernel 1/T folding.
    ref_t = _reference(features, labels, temperature=0.5)
    loss_t = supcon_loss_clear(features, labels, temperature=0.5, use_bf16=False)
    jax.block_until_ready(loss_t)
    assert jnp.allclose(loss_t, ref_t, atol=1e-4, rtol=1e-4), (loss_t, ref_t)

    print("KERNEL_OK")
</pallas_src>

<mosaic_0001>
module attributes {stable_mosaic.version = 11 : i64} {
  func.func @_supcon_tile_kernel(%arg0: i32, %arg1: memref<128x32xf32, #tpu.memory_space<vmem>>, %arg2: memref<128x1xi32, #tpu.memory_space<vmem>>, %arg3: memref<1x128xi32, #tpu.memory_space<vmem>>, %arg4: memref<2x128xf32, #tpu.memory_space<vmem>>) attributes {dimension_semantics = [#tpu.dimension_semantics<parallel>], iteration_bounds = array<i64: 1>, scalar_prefetch = 0 : i64, scratch_operands = 0 : i64, tpu.core_type = #tpu.core_type<tc>, window_params = [{pipeline_mode = #tpu.pipeline_mode<synchronous>, transform_indices = @transform_0, window_bounds = array<i64: 128, 32>}, {transform_indices = @transform_1, window_bounds = array<i64: 128, 1>}, {pipeline_mode = #tpu.pipeline_mode<synchronous>, transform_indices = @transform_2, window_bounds = array<i64: 1, 128>}, {transform_indices = @transform_3, window_bounds = array<i64: 2, 128>}]} {
    %c128_i32 = arith.constant 128 : i32
    %0 = arith.muli %arg0, %c128_i32 : i32
    %c0 = arith.constant 0 : index
    %c0_0 = arith.constant 0 : index
    %1 = vector.load %arg1[%c0, %c0_0] : memref<128x32xf32, #tpu.memory_space<vmem>>, vector<128x32xf32>
    %2 = tpu.assume_multiple %0, 128 : i32
    %3 = arith.index_cast %2 : i32 to index
    %c0_1 = arith.constant 0 : index
    %4 = vector.load %arg1[%3, %c0_1] : memref<128x32xf32, #tpu.memory_space<vmem>>, vector<128x32xf32>
    %c0_2 = arith.constant 0 : index
    %c0_3 = arith.constant 0 : index
    %5 = vector.load %arg2[%c0_2, %c0_3] : memref<128x1xi32, #tpu.memory_space<vmem>>, vector<128x1xi32>
    %c0_4 = arith.constant 0 : index
    %c0_5 = arith.constant 0 : index
    %6 = vector.load %arg3[%c0_4, %c0_5] : memref<1x128xi32, #tpu.memory_space<vmem>>, vector<1x128xi32>
    %cst = arith.constant dense<0.000000e+00> : vector<128x128xf32>
    %7 = tpu.matmul %4, %1, %cst {dimension_numbers = #tpu.dot_dimension_numbers<[1], [1], [0], [0], [0, 0, 1, 0], [], []>} : vector<128x32xf32>, vector<128x32xf32>, vector<128x128xf32> -> vector<128x128xf32>
    %cst_6 = arith.constant dense<0xFF800000> : vector<128xf32>
    %8 = vector.multi_reduction <maximumf>, %7, %cst_6 [1] : vector<128x128xf32> to vector<128xf32>
    %9 = vector.shape_cast %8 : vector<128xf32> to vector<128x1xf32>
    %10 = vector.broadcast %9 : vector<128x1xf32> to vector<128x128xf32>
    %11 = arith.subf %7, %10 : vector<128x128xf32>
    %12 = tpu.iota {dimensions = array<i32: 0>} : vector<128x128xi32>
    %13 = vector.broadcast %0 : i32 to vector<128x128xi32>
    %14 = arith.addi %12, %13 : vector<128x128xi32>
    %15 = tpu.iota {dimensions = array<i32: 1>} : vector<128x128xi32>
    %16 = arith.cmpi eq, %14, %15 : vector<128x128xi32>
    %c8_i32 = arith.constant 8 : i32
    %17 = vector.broadcast %c8_i32 : i32 to vector<128x128xi32>
    %18 = arith.cmpi sge, %15, %17 : vector<128x128xi32>
    %19 = arith.ori %16, %18 : vector<128x128xi1>
    %20 = vector.broadcast %5 : vector<128x1xi32> to vector<128x128xi32>
    %21 = vector.broadcast %6 : vector<1x128xi32> to vector<128x128xi32>
    %22 = arith.cmpi eq, %20, %21 : vector<128x128xi32>
    %23 = arith.extui %22 : vector<128x128xi1> to vector<128x128xi32>
    %24 = arith.sitofp %23 : vector<128x128xi32> to vector<128x128xf32>
    %cst_7 = arith.constant 0.000000e+00 : f32
    %25 = vector.broadcast %cst_7 : f32 to vector<128x128xf32>
    %26 = arith.select %19, %25, %24 : vector<128x128xi1>, vector<128x128xf32>
    %27 = math.exp %11 : vector<128x128xf32>
    %cst_8 = arith.constant 0.000000e+00 : f32
    %28 = vector.broadcast %cst_8 : f32 to vector<128x128xf32>
    %29 = arith.select %19, %28, %27 : vector<128x128xi1>, vector<128x128xf32>
    %cst_9 = arith.constant 1.000000e+00 : f32
    %30 = vector.broadcast %cst_9 : f32 to vector<1x128xf32>
    %cst_10 = arith.constant dense<0.000000e+00> : vector<1x128xf32>
    %31 = tpu.matmul %30, %26, %cst_10 {dimension_numbers = #tpu.dot_dimension_numbers<[1], [1], [0], [0], [0, 0, 1, 0], [], []>} : vector<1x128xf32>, vector<128x128xf32>, vector<1x128xf32> -> vector<1x128xf32>
    %cst_11 = arith.constant dense<0.000000e+00> : vector<1x128xf32>
    %32 = tpu.matmul %30, %29, %cst_11 {dimension_numbers = #tpu.dot_dimension_numbers<[1], [1], [0], [0], [0, 0, 1, 0], [], []>} : vector<1x128xf32>, vector<128x128xf32>, vector<1x128xf32> -> vector<1x128xf32>
    %33 = arith.mulf %26, %11 : vector<128x128xf32>
    %cst_12 = arith.constant dense<0.000000e+00> : vector<1x128xf32>
    %34 = tpu.matmul %30, %33, %cst_12 {dimension_numbers = #tpu.dot_dimension_numbers<[1], [1], [0], [0], [0, 0, 1, 0], [], []>} : vector<1x128xf32>, vector<128x128xf32>, vector<1x128xf32> -> vector<1x128xf32>
    %cst_13 = arith.constant 0.000000e+00 : f32
    %35 = vector.broadcast %cst_13 : f32 to vector<1x128xf32>
    %36 = arith.cmpf oeq, %31, %35 : vector<1x128xf32>
    %37 = arith.extui %36 : vector<1x128xi1> to vector<1x128xi32>
    %38 = arith.sitofp %37 : vector<1x128xi32> to vector<1x128xf32>
    %39 = math.log %32 : vector<1x128xf32>
    %40 = arith.mulf %31, %39 : vector<1x128xf32>
    %41 = arith.subf %34, %40 : vector<1x128xf32>
    %42 = arith.addf %31, %38 : vector<1x128xf32>
    %43 = tpu.reciprocal %42 : vector<1x128xf32> -> vector<1x128xf32>
    %44 = arith.mulf %41, %43 : vector<1x128xf32>
    %cst_14 = arith.constant 0.000000e+00 : f32
    %45 = vector.broadcast %cst_14 : f32 to vector<1x128xf32>
    %46 = arith.subf %45, %44 : vector<1x128xf32>
    %cst_15 = arith.constant 1.000000e+00 : f32
    %47 = vector.broadcast %cst_15 : f32 to vector<1x128xf32>
    %48 = arith.subf %47, %38 : vector<1x128xf32>
    %49 = arith.mulf %46, %48 : vector<1x128xf32>
    %50 = tpu.concatenate %49, %38 in 0 : vector<1x128xf32>, vector<1x128xf32> -> vector<2x128xf32>
    %c0_16 = arith.constant 0 : index
    %c0_17 = arith.constant 0 : index
    %51 = vector.load %arg4[%c0_16, %c0_17] : memref<2x128xf32, #tpu.memory_space<vmem>>, vector<2x128xf32>
    tpu.vector_store %arg4[%c0_16, %c0_17], %50 {strides = array<i32>} : memref<2x128xf32, #tpu.memory_space<vmem>>, vector<2x128xf32>,
    return
  }
  func.func @transform_0(%arg0: i32) -> (i32, i32) {
    %c0_i32 = arith.constant 0 : i32
    %c0_i32_0 = arith.constant 0 : i32
    %c0_i32_1 = arith.constant 0 : i32
    return %c0_i32, %c0_i32_0 : i32, i32
  }
  func.func @transform_1(%arg0: i32) -> (i32, i32) {
    %c0_i32 = arith.constant 0 : i32
    %c0_i32_0 = arith.constant 0 : i32
    return %arg0, %c0_i32 : i32, i32
  }
  func.func @transform_2(%arg0: i32) -> (i32, i32) {
    %c0_i32 = arith.constant 0 : i32
    %c0_i32_0 = arith.constant 0 : i32
    %c0_i32_1 = arith.constant 0 : i32
    return %c0_i32, %c0_i32_0 : i32, i32
  }
  func.func @transform_3(%arg0: i32) -> (i32, i32) {
    %c0_i32 = arith.constant 0 : i32
    %c0_i32_0 = arith.constant 0 : i32
    return %c0_i32, %arg0 : i32, i32
  }
}

</mosaic_0001>

<llo_original>
// kernel: tpu_custom_call.1
$region0: #{tpu_custom_call.1}
  #allocation0 [shape = 'u32[]', space=smem, size = 0x4, offset = 0x4, fixed_abs, tag = 'smem constant byte address 0x4 - core index']
  #allocation1 [shape = 'u32[72,128]{1,0:T(1,128)}', space=vmem, size = 0x9000, scoped, tag = 'internal scratch']
  %s0 = inlined_call_operand.vmem [shape: f32[128,32], index: 0, kind: input, shape index: {}]
  %s1 = inlined_call_operand.vmem [shape: s32[128,1], index: 1, kind: input, shape index: {}]
  %s2 = inlined_call_operand.vmem [shape: s32[1,128], index: 2, kind: input, shape index: {}]
  %s3 = inlined_call_operand.hbm [shape: f32[2,128], index: 3, kind: output, shape index: {}]
  %s4 = sld [smem:[#allocation0]]
  $region22: #{tpu_custom_call.1} parent=0
    _
  %s6 = ssub.s32 1, %s4
  %s7 = scalar_select 0, %s6, %s4
  $region1: #{tpu_custom_call.1} parent=0
    #allocation2 [shape = 'u8[1024]{0}', space=vmem, size = 0x400, scoped, tag = 'output window, operand 0, single buffered']
    #allocation3 [shape = 's32[1]{0}', space=sflag, size = 0x4, scoped, tag = 'scoped memory for tpu_custom_call.1']
    %8 = vsyncpa [#allocation3], 0
    // Predicated region
    $region2: #{tpu_custom_call.1} parent=1 // pred_check
      _
    $region3: #{tpu_custom_call.1} parent=1 // pred_check_branch
      %10 = sbr.rel (0) target = $region5
    $region4: #{tpu_custom_call.1} parent=1 // pred_region
      _
    $region5: #{tpu_custom_call.1} parent=1 // pred_fallthru
      _
    // Predicated region
    $region6: #{tpu_custom_call.1} parent=1 // pred_check
      _
    $region7: #{tpu_custom_call.1} parent=1 // pred_check_branch
      %12 = sbr.rel (0) target = $region9
    $region8: #{tpu_custom_call.1} parent=1 // pred_region
      _
    $region9: #{tpu_custom_call.1} parent=1 // pred_fallthru
      _
    // Predicated region
    $region10: #{tpu_custom_call.1} parent=1 // pred_check
      _
    $region11: #{tpu_custom_call.1} parent=1 // pred_check_branch
      %14 = sbr.rel (0) target = $region13
    $region12: #{tpu_custom_call.1} parent=1 // pred_region
      _
    $region13: #{tpu_custom_call.1} parent=1 // pred_fallthru
      _
    %s15 = smul.u32 0, 128
    %v16 = vld [vmem:[%s0] sm:$0xff]
    %v17 = vld [vmem:[%s0 + $0x8] sm:$0xff]
    %v18 = vld [vmem:[%s0 + $0x10] sm:$0xff]
    %v19 = vld [vmem:[%s0 + $0x18] sm:$0xff]
    %v20 = vld [vmem:[%s0 + $0x20] sm:$0xff]
    %v21 = vld [vmem:[%s0 + $0x28] sm:$0xff]
    %v22 = vld [vmem:[%s0 + $0x30] sm:$0xff]
    %v23 = vld [vmem:[%s0 + $0x38] sm:$0xff]
    %v24 = vld [vmem:[%s0 + $0x40] sm:$0xff]
    %v25 = vld [vmem:[%s0 + $0x48] sm:$0xff]
    %v26 = vld [vmem:[%s0 + $0x50] sm:$0xff]
    %v27 = vld [vmem:[%s0 + $0x58] sm:$0xff]
    %v28 = vld [vmem:[%s0 + $0x60] sm:$0xff]
    %v29 = vld [vmem:[%s0 + $0x68] sm:$0xff]
    %v30 = vld [vmem:[%s0 + $0x70] sm:$0xff]
    %v31 = vld [vmem:[%s0 + $0x78] sm:$0xff]
    %s32 = scalar_lea.vmem %s0, %s15
    %v33 = vld [vmem:[%s32] sm:$0xff]
    %v34 = vld [vmem:[%s32 + $0x8] sm:$0xff]
    %v35 = vld [vmem:[%s32 + $0x10] sm:$0xff]
    %v36 = vld [vmem:[%s32 + $0x18] sm:$0xff]
    %v37 = vld [vmem:[%s32 + $0x20] sm:$0xff]
    %v38 = vld [vmem:[%s32 + $0x28] sm:$0xff]
    %v39 = vld [vmem:[%s32 + $0x30] sm:$0xff]
    %v40 = vld [vmem:[%s32 + $0x38] sm:$0xff]
    %v41 = vld [vmem:[%s32 + $0x40] sm:$0xff]
    %v42 = vld [vmem:[%s32 + $0x48] sm:$0xff]
    %v43 = vld [vmem:[%s32 + $0x50] sm:$0xff]
    %v44 = vld [vmem:[%s32 + $0x58] sm:$0xff]
    %v45 = vld [vmem:[%s32 + $0x60] sm:$0xff]
    %v46 = vld [vmem:[%s32 + $0x68] sm:$0xff]
    %v47 = vld [vmem:[%s32 + $0x70] sm:$0xff]
    %v48 = vld [vmem:[%s32 + $0x78] sm:$0xff]
    %v49 = vld [vmem:[%s1] sm:$0xff]
    %v50 = vld [vmem:[%s1 + $0x8] sm:$0xff]
    %v51 = vld [vmem:[%s1 + $0x10] sm:$0xff]
    %v52 = vld [vmem:[%s1 + $0x18] sm:$0xff]
    %v53 = vld [vmem:[%s1 + $0x20] sm:$0xff]
    %v54 = vld [vmem:[%s1 + $0x28] sm:$0xff]
    %v55 = vld [vmem:[%s1 + $0x30] sm:$0xff]
    %v56 = vld [vmem:[%s1 + $0x38] sm:$0xff]
    %v57 = vld [vmem:[%s1 + $0x40] sm:$0xff]
    %v58 = vld [vmem:[%s1 + $0x48] sm:$0xff]
    %v59 = vld [vmem:[%s1 + $0x50] sm:$0xff]
    %v60 = vld [vmem:[%s1 + $0x58] sm:$0xff]
    %v61 = vld [vmem:[%s1 + $0x60] sm:$0xff]
    %v62 = vld [vmem:[%s1 + $0x68] sm:$0xff]
    %v63 = vld [vmem:[%s1 + $0x70] sm:$0xff]
    %v64 = vld [vmem:[%s1 + $0x78] sm:$0xff]
    %v65 = vld [vmem:[%s2] sm:$0x1]
    %vm66 = vcmask 261120
    %v68 = vsel %vm66, %v33, 0
    %v71 = vsel %vm66, %v34, 0
    %v74 = vsel %vm66, %v35, 0
    %v77 = vsel %vm66, %v36, 0
    %v80 = vsel %vm66, %v37, 0
    %v83 = vsel %vm66, %v38, 0
    %v86 = vsel %vm66, %v39, 0
    %v89 = vsel %vm66, %v40, 0
    %v92 = vsel %vm66, %v41, 0
    %v95 = vsel %vm66, %v42, 0
    %v98 = vsel %vm66, %v43, 0
    %v101 = vsel %vm66, %v44, 0
    %v104 = vsel %vm66, %v45, 0
    %v107 = vsel %vm66, %v46, 0
    %v110 = vsel %vm66, %v47, 0
    %v113 = vsel %vm66, %v48, 0
    %v116 = vsel %vm66, %v16, 0
    %v119 = vsel %vm66, %v17, 0
    %v122 = vsel %vm66, %v18, 0
    %v125 = vsel %vm66, %v19, 0
    %v128 = vsel %vm66, %v20, 0
    %v131 = vsel %vm66, %v21, 0
    %v134 = vsel %vm66, %v22, 0
    %v137 = vsel %vm66, %v23, 0
    %v140 = vsel %vm66, %v24, 0
    %v143 = vsel %vm66, %v25, 0
    %v146 = vsel %vm66, %v26, 0
    %v149 = vsel %vm66, %v27, 0
    %v152 = vsel %vm66, %v28, 0
    %v155 = vsel %vm66, %v29, 0
    %v158 = vsel %vm66, %v30, 0
    %v161 = vsel %vm66, %v31, 0
    %163 = vmatpush.xpose.msra.mxu0 %v161
    %164 = vmatpush.xpose.msra.mxu0 %v158
    %165 = vmatpush.xpose.msra.mxu0 %v155
    %166 = vmatpush.xpose.msra.mxu0 %v152
    %167 = vmatpush.xpose.msra.mxu0 %v149
    %168 = vmatpush.xpose.msra.mxu0 %v146
    %169 = vmatpush.xpose.msra.mxu0 %v143
    %170 = vmatpush.xpose.msra.mxu0 %v140
    %171 = vmatpush.xpose.msra.mxu0 %v137
    %172 = vmatpush.xpose.msra.mxu0 %v134
    %173 = vmatpush.xpose.msra.mxu0 %v131
    %174 = vmatpush.xpose.msra.mxu0 %v128
    %175 = vmatpush.xpose.msra.mxu0 %v125
    %176 = vmatpush.xpose.msra.mxu0 %v122
    %177 = vmatpush.xpose.msra.mxu0 %v119
    %178 = vmatpush.xpose.msra.mxu0 %v116
    %179 = vmatmul.f32.gmra.mxu0 %v68
    %v180 = vpop.f32.mrf.mxu0
    %v181 = vadd.f32 0.0, %v180
    %182 = vmatmul.f32.gmra.mxu0 %v71
    %v183 = vpop.f32.mrf.mxu0
    %v184 = vadd.f32 0.0, %v183
    %185 = vmatmul.f32.gmra.mxu0 %v74
    %v186 = vpop.f32.mrf.mxu0
    %v187 = vadd.f32 0.0, %v186
    %188 = vmatmul.f32.gmra.mxu0 %v77
    %v189 = vpop.f32.mrf.mxu0
    %v190 = vadd.f32 0.0, %v189
    %191 = vmatmul.f32.gmra.mxu0 %v80
    %v192 = vpop.f32.mrf.mxu0
    %v193 = vadd.f32 0.0, %v192
    %194 = vmatmul.f32.gmra.mxu0 %v83
    %v195 = vpop.f32.mrf.mxu0
    %v196 = vadd.f32 0.0, %v195
    %197 = vmatmul.f32.gmra.mxu0 %v86
    %v198 = vpop.f32.mrf.mxu0
    %v199 = vadd.f32 0.0, %v198
    %200 = vmatmul.f32.gmra.mxu0 %v89
    %v201 = vpop.f32.mrf.mxu0
    %v202 = vadd.f32 0.0, %v201
    %203 = vmatmul.f32.gmra.mxu0 %v92
    %v204 = vpop.f32.mrf.mxu0
    %v205 = vadd.f32 0.0, %v204
    %206 = vmatmul.f32.gmra.mxu0 %v95
    %v207 = vpop.f32.mrf.mxu0
    %v208 = vadd.f32 0.0, %v207
    %209 = vmatmul.f32.gmra.mxu0 %v98
    %v210 = vpop.f32.mrf.mxu0
    %v211 = vadd.f32 0.0, %v210
    %212 = vmatmul.f32.gmra.mxu0 %v101
    %v213 = vpop.f32.mrf.mxu0
    %v214 = vadd.f32 0.0, %v213
    %215 = vmatmul.f32.gmra.mxu0 %v104
    %v216 = vpop.f32.mrf.mxu0
    %v217 = vadd.f32 0.0, %v216
    %218 = vmatmul.f32.gmra.mxu0 %v107
    %v219 = vpop.f32.mrf.mxu0
    %v220 = vadd.f32 0.0, %v219
    %221 = vmatmul.f32.gmra.mxu0 %v110
    %v222 = vpop.f32.mrf.mxu0
    %v223 = vadd.f32 0.0, %v222
    %224 = vmatmul.f32.gmra.mxu0 %v113
    %v225 = vpop.f32.mrf.mxu0
    %v226 = vadd.f32 0.0, %v225
    %227 = vdwg.mxu0
    %228 = vmax.xlane.f32.xlu0 %v181
    %v229 = vpop.xlane.xlu0 %228
    %230 = vmax.xlane.f32.xlu0 %v184
    %v231 = vpop.xlane.xlu0 %230
    %232 = vmax.xlane.f32.xlu0 %v187
    %v233 = vpop.xlane.xlu0 %232
    %234 = vmax.xlane.f32.xlu0 %v190
    %v235 = vpop.xlane.xlu0 %234
    %236 = vmax.xlane.f32.xlu0 %v193
    %v237 = vpop.xlane.xlu0 %236
    %238 = vmax.xlane.f32.xlu0 %v196
    %v239 = vpop.xlane.xlu0 %238
    %240 = vmax.xlane.f32.xlu0 %v199
    %v241 = vpop.xlane.xlu0 %240
    %242 = vmax.xlane.f32.xlu0 %v202
    %v243 = vpop.xlane.xlu0 %242
    %244 = vmax.xlane.f32.xlu0 %v205
    %v245 = vpop.xlane.xlu0 %244
    %246 = vmax.xlane.f32.xlu0 %v208
    %v247 = vpop.xlane.xlu0 %246
    %248 = vmax.xlane.f32.xlu0 %v211
    %v249 = vpop.xlane.xlu0 %248
    %250 = vmax.xlane.f32.xlu0 %v214
    %v251 = vpop.xlane.xlu0 %250
    %252 = vmax.xlane.f32.xlu0 %v217
    %v253 = vpop.xlane.xlu0 %252
    %254 = vmax.xlane.f32.xlu0 %v220
    %v255 = vpop.xlane.xlu0 %254
    %256 = vmax.xlane.f32.xlu0 %v223
    %v257 = vpop.xlane.xlu0 %256
    %258 = vmax.xlane.f32.xlu0 %v226
    %v259 = vpop.xlane.xlu0 %258
    %v260 = vsub.f32 %v181, %v229
    %v261 = vsub.f32 %v184, %v231
    %v262 = vsub.f32 %v187, %v233
    %v263 = vsub.f32 %v190, %v235
    %v264 = vsub.f32 %v193, %v237
    %v265 = vsub.f32 %v196, %v239
    %v266 = vsub.f32 %v199, %v241
    %v267 = vsub.f32 %v202, %v243
    %v268 = vsub.f32 %v205, %v245
    %v269 = vsub.f32 %v208, %v247
    %v270 = vsub.f32 %v211, %v249
    %v271 = vsub.f32 %v214, %v251
    %v272 = vsub.f32 %v217, %v253
    %v273 = vsub.f32 %v220, %v255
    %v274 = vsub.f32 %v223, %v257
    %v275 = vsub.f32 %v226, %v259
    %v276 = vlaneseq
    %v277 = vshrl.u32 %v276, 7
    %v278 = vadd.s32 %v277, 8
    %v279 = vadd.s32 %v277, 16
    %v280 = vadd.s32 %v277, 24
    %v281 = vadd.s32 %v277, 32
    %v282 = vadd.s32 %v277, 40
    %v283 = vadd.s32 %v277, 48
    %v284 = vadd.s32 %v277, 56
    %v285 = vadd.s32 %v277, 64
    %v286 = vadd.s32 %v277, 72
    %v287 = vadd.s32 %v277, 80
    %v288 = vadd.s32 %v277, 88
    %v289 = vadd.s32 %v277, 96
    %v290 = vadd.s32 %v277, 104
    %v291 = vadd.s32 %v277, 112
    %v292 = vadd.s32 %v277, 120
    %v293 = vstv %s15
    %v294 = vadd.s32 %v277, %v293
    %v295 = vadd.s32 %v278, %v293
    %v296 = vadd.s32 %v279, %v293
    %v297 = vadd.s32 %v280, %v293
    %v298 = vadd.s32 %v281, %v293
    %v299 = vadd.s32 %v282, %v293
    %v300 = vadd.s32 %v283, %v293
    %v301 = vadd.s32 %v284, %v293
    %v302 = vadd.s32 %v285, %v293
    %v303 = vadd.s32 %v286, %v293
    %v304 = vadd.s32 %v287, %v293
    %v305 = vadd.s32 %v288, %v293
    %v306 = vadd.s32 %v289, %v293
    %v307 = vadd.s32 %v290, %v293
    %v308 = vadd.s32 %v291, %v293
    %v309 = vadd.s32 %v292, %v293
    %v310 = vlaneseq
    %v311 = vand.u32 %v310, 127
    %vm312 = vcmp.eq.s32.totalorder %v294, %v311
    %vm313 = vcmp.eq.s32.totalorder %v295, %v311
    %vm314 = vcmp.eq.s32.totalorder %v296, %v311
    %vm315 = vcmp.eq.s32.totalorder %v297, %v311
    %vm316 = vcmp.eq.s32.totalorder %v298, %v311
    %vm317 = vcmp.eq.s32.totalorder %v299, %v311
    %vm318 = vcmp.eq.s32.totalorder %v300, %v311
    %vm319 = vcmp.eq.s32.totalorder %v301, %v311
    %vm320 = vcmp.eq.s32.totalorder %v302, %v311
    %vm321 = vcmp.eq.s32.totalorder %v303, %v311
    %vm322 = vcmp.eq.s32.totalorder %v304, %v311
    %vm323 = vcmp.eq.s32.totalorder %v305, %v311
    %vm324 = vcmp.eq.s32.totalorder %v306, %v311
    %vm325 = vcmp.eq.s32.totalorder %v307, %v311
    %vm326 = vcmp.eq.s32.totalorder %v308, %v311
    %vm327 = vcmp.eq.s32.totalorder %v309, %v311
    %vm328 = vcmp.ge.s32.totalorder %v311, 8
    %vm329 = vmor %vm312, %vm328
    %vm330 = vmor %vm313, %vm328
    %vm331 = vmor %vm314, %vm328
    %vm332 = vmor %vm315, %vm328
    %vm333 = vmor %vm316, %vm328
    %vm334 = vmor %vm317, %vm328
    %vm335 = vmor %vm318, %vm328
    %vm336 = vmor %vm319, %vm328
    %vm337 = vmor %vm320, %vm328
    %vm338 = vmor %vm321, %vm328
    %vm339 = vmor %vm322, %vm328
    %vm340 = vmor %vm323, %vm328
    %vm341 = vmor %vm324, %vm328
    %vm342 = vmor %vm325, %vm328
    %vm343 = vmor %vm326, %vm328
    %vm344 = vmor %vm327, %vm328
    %345 = vset.pattern.permute.xlu0 0
    %346 = vperm.xlu0 %345, %v49
    %v347 = vpop.permute.xlu0 %346
    %348 = vset.pattern.permute.xlu0 0
    %349 = vperm.xlu0 %348, %v50
    %v350 = vpop.permute.xlu0 %349
    %351 = vset.pattern.permute.xlu0 0
    %352 = vperm.xlu0 %351, %v51
    %v353 = vpop.permute.xlu0 %352
    %354 = vset.pattern.permute.xlu0 0
    %355 = vperm.xlu0 %354, %v52
    %v356 = vpop.permute.xlu0 %355
    %357 = vset.pattern.permute.xlu0 0
    %358 = vperm.xlu0 %357, %v53
    %v359 = vpop.permute.xlu0 %358
    %360 = vset.pattern.permute.xlu0 0
    %361 = vperm.xlu0 %360, %v54
    %v362 = vpop.permute.xlu0 %361
    %363 = vset.pattern.permute.xlu0 0
    %364 = vperm.xlu0 %363, %v55
    %v365 = vpop.permute.xlu0 %364
    %366 = vset.pattern.permute.xlu0 0
    %367 = vperm.xlu0 %366, %v56
    %v368 = vpop.permute.xlu0 %367
    %369 = vset.pattern.permute.xlu0 0
    %370 = vperm.xlu0 %369, %v57
    %v371 = vpop.permute.xlu0 %370
    %372 = vset.pattern.permute.xlu0 0
    %373 = vperm.xlu0 %372, %v58
    %v374 = vpop.permute.xlu0 %373
    %375 = vset.pattern.permute.xlu0 0
    %376 = vperm.xlu0 %375, %v59
    %v377 = vpop.permute.xlu0 %376
    %378 = vset.pattern.permute.xlu0 0
    %379 = vperm.xlu0 %378, %v60
    %v380 = vpop.permute.xlu0 %379
    %381 = vset.pattern.permute.xlu0 0
    %382 = vperm.xlu0 %381, %v61
    %v383 = vpop.permute.xlu0 %382
    %384 = vset.pattern.permute.xlu0 0
    %385 = vperm.xlu0 %384, %v62
    %v386 = vpop.permute.xlu0 %385
    %387 = vset.pattern.permute.xlu0 0
    %388 = vperm.xlu0 %387, %v63
    %v389 = vpop.permute.xlu0 %388
    %390 = vset.pattern.permute.xlu0 0
    %391 = vperm.xlu0 %390, %v64
    %v392 = vpop.permute.xlu0 %391
    %v393 = vperm.slane %v65, 0
    %vm394 = vcmp.eq.s32.totalorder %v347, %v393
    %vm395 = vcmp.eq.s32.totalorder %v350, %v393
    %vm396 = vcmp.eq.s32.totalorder %v353, %v393
    %vm397 = vcmp.eq.s32.totalorder %v356, %v393
    %vm398 = vcmp.eq.s32.totalorder %v359, %v393
    %vm399 = vcmp.eq.s32.totalorder %v362, %v393
    %vm400 = vcmp.eq.s32.totalorder %v365, %v393
    %vm401 = vcmp.eq.s32.totalorder %v368, %v393
    %vm402 = vcmp.eq.s32.totalorder %v371, %v393
    %vm403 = vcmp.eq.s32.totalorder %v374, %v393
    %vm404 = vcmp.eq.s32.totalorder %v377, %v393
    %vm405 = vcmp.eq.s32.totalorder %v380, %v393
    %vm406 = vcmp.eq.s32.totalorder %v383, %v393
    %vm407 = vcmp.eq.s32.totalorder %v386, %v393
    %vm408 = vcmp.eq.s32.totalorder %v389, %v393
    %vm409 = vcmp.eq.s32.totalorder %v392, %v393
    %v410 = vsel %vm394, 1, 0
    %v411 = vsel %vm395, 1, 0
    %v412 = vsel %vm396, 1, 0
    %v413 = vsel %vm397, 1, 0
    %v414 = vsel %vm398, 1, 0
    %v415 = vsel %vm399, 1, 0
    %v416 = vsel %vm400, 1, 0
    %v417 = vsel %vm401, 1, 0
    %v418 = vsel %vm402, 1, 0
    %v419 = vsel %vm403, 1, 0
    %v420 = vsel %vm404, 1, 0
    %v421 = vsel %vm405, 1, 0
    %v422 = vsel %vm406, 1, 0
    %v423 = vsel %vm407, 1, 0
    %v424 = vsel %vm408, 1, 0
    %v425 = vsel %vm409, 1, 0
    %v426 = vcvt.s32.f32 %v410
    %v427 = vcvt.s32.f32 %v411
    %v428 = vcvt.s32.f32 %v412
    %v429 = vcvt.s32.f32 %v413
    %v430 = vcvt.s32.f32 %v414
    %v431 = vcvt.s32.f32 %v415
    %v432 = vcvt.s32.f32 %v416
    %v433 = vcvt.s32.f32 %v417
    %v434 = vcvt.s32.f32 %v418
    %v435 = vcvt.s32.f32 %v419
    %v436 = vcvt.s32.f32 %v420
    %v437 = vcvt.s32.f32 %v421
    %v438 = vcvt.s32.f32 %v422
    %v439 = vcvt.s32.f32 %v423
    %v440 = vcvt.s32.f32 %v424
    %v441 = vcvt.s32.f32 %v425
    %v442 = vsel %vm329, 0.0, %v426
    %v443 = vsel %vm330, 0.0, %v427
    %v444 = vsel %vm331, 0.0, %v428
    %v445 = vsel %vm332, 0.0, %v429
    %v446 = vsel %vm333, 0.0, %v430
    %v447 = vsel %vm334, 0.0, %v431
    %v448 = vsel %vm335, 0.0, %v432
    %v449 = vsel %vm336, 0.0, %v433
    %v450 = vsel %vm337, 0.0, %v434
    %v451 = vsel %vm338, 0.0, %v435
    %v452 = vsel %vm339, 0.0, %v436
    %v453 = vsel %vm340, 0.0, %v437
    %v454 = vsel %vm341, 0.0, %v438
    %v455 = vsel %vm342, 0.0, %v439
    %v456 = vsel %vm343, 0.0, %v440
    %v457 = vsel %vm344, 0.0, %v441
    %v458 = vmul.f32 %v260, 1.442695
    %v459 = vpow.pop %v458
    %v460 = vmul.f32 %v261, 1.442695
    %v461 = vpow.pop %v460
    %v462 = vmul.f32 %v262, 1.442695
    %v463 = vpow.pop %v462
    %v464 = vmul.f32 %v263, 1.442695
    %v465 = vpow.pop %v464
    %v466 = vmul.f32 %v264, 1.442695
    %v467 = vpow.pop %v466
    %v468 = vmul.f32 %v265, 1.442695
    %v469 = vpow.pop %v468
    %v470 = vmul.f32 %v266, 1.442695
    %v471 = vpow.pop %v470
    %v472 = vmul.f32 %v267, 1.442695
    %v473 = vpow.pop %v472
    %v474 = vmul.f32 %v268, 1.442695
    %v475 = vpow.pop %v474
    %v476 = vmul.f32 %v269, 1.442695
    %v477 = vpow.pop %v476
    %v478 = vmul.f32 %v270, 1.442695
    %v479 = vpow.pop %v478
    %v480 = vmul.f32 %v271, 1.442695
    %v481 = vpow.pop %v480
    %v482 = vmul.f32 %v272, 1.442695
    %v483 = vpow.pop %v482
    %v484 = vmul.f32 %v273, 1.442695
    %v485 = vpow.pop %v484
    %v486 = vmul.f32 %v274, 1.442695
    %v487 = vpow.pop %v486
    %v488 = vmul.f32 %v275, 1.442695
    %v489 = vpow.pop %v488
    %v490 = vsel %vm329, 0.0, %v459
    %v491 = vsel %vm330, 0.0, %v461
    %v492 = vsel %vm331, 0.0, %v463
    %v493 = vsel %vm332, 0.0, %v465
    %v494 = vsel %vm333, 0.0, %v467
    %v495 = vsel %vm334, 0.0, %v469
    %v496 = vsel %vm335, 0.0, %v471
    %v497 = vsel %vm336, 0.0, %v473
    %v498 = vsel %vm337, 0.0, %v475
    %v499 = vsel %vm338, 0.0, %v477
    %v500 = vsel %vm339, 0.0, %v479
    %v501 = vsel %vm340, 0.0, %v481
    %v502 = vsel %vm341, 0.0, %v483
    %v503 = vsel %vm342, 0.0, %v485
    %v504 = vsel %vm343, 0.0, %v487
    %v505 = vsel %vm344, 0.0, %v489
    %506 = vmatpush.xpose.msra.mxu0 %v457
    %507 = vmatpush.xpose.msra.mxu0 %v456
    %508 = vmatpush.xpose.msra.mxu0 %v455
    %509 = vmatpush.xpose.msra.mxu0 %v454
    %510 = vmatpush.xpose.msra.mxu0 %v453
    %511 = vmatpush.xpose.msra.mxu0 %v452
    %512 = vmatpush.xpose.msra.mxu0 %v451
    %513 = vmatpush.xpose.msra.mxu0 %v450
    %514 = vmatpush.xpose.msra.mxu0 %v449
    %515 = vmatpush.xpose.msra.mxu0 %v448
    %516 = vmatpush.xpose.msra.mxu0 %v447
    %517 = vmatpush.xpose.msra.mxu0 %v446
    %518 = vmatpush.xpose.msra.mxu0 %v445
    %519 = vmatpush.xpose.msra.mxu0 %v444
    %520 = vmatpush.xpose.msra.mxu0 %v443
    %521 = vmatpush.xpose.msra.mxu0 %v442
    %522 = vmatmul.f32.gmra.mxu0 1.0
    %v523 = vpop.f32.mrf.mxu0
    %v524 = vadd.f32 0.0, %v523
    %525 = vdwg.mxu0
    %526 = vmatpush.xpose.msra.mxu0 %v505
    %527 = vmatpush.xpose.msra.mxu0 %v504
    %528 = vmatpush.xpose.msra.mxu0 %v503
    %529 = vmatpush.xpose.msra.mxu0 %v502
    %530 = vmatpush.xpose.msra.mxu0 %v501
    %531 = vmatpush.xpose.msra.mxu0 %v500
    %532 = vmatpush.xpose.msra.mxu0 %v499
    %533 = vmatpush.xpose.msra.mxu0 %v498
    %534 = vmatpush.xpose.msra.mxu0 %v497
    %535 = vmatpush.xpose.msra.mxu0 %v496
    %536 = vmatpush.xpose.msra.mxu0 %v495
    %537 = vmatpush.xpose.msra.mxu0 %v494
    %538 = vmatpush.xpose.msra.mxu0 %v493
    %539 = vmatpush.xpose.msra.mxu0 %v492
    %540 = vmatpush.xpose.msra.mxu0 %v491
    %541 = vmatpush.xpose.msra.mxu0 %v490
    %542 = vmatmul.f32.gmra.mxu0 1.0
    %v543 = vpop.f32.mrf.mxu0
    %v544 = vadd.f32 0.0, %v543
    %545 = vdwg.mxu0
    %v546 = vmul.f32 %v442, %v260
    %v547 = vmul.f32 %v443, %v261
    %v548 = vmul.f32 %v444, %v262
    %v549 = vmul.f32 %v445, %v263
    %v550 = vmul.f32 %v446, %v264
    %v551 = vmul.f32 %v447, %v265
    %v552 = vmul.f32 %v448, %v266
    %v553 = vmul.f32 %v449, %v267
    %v554 = vmul.f32 %v450, %v268
    %v555 = vmul.f32 %v451, %v269
    %v556 = vmul.f32 %v452, %v270
    %v557 = vmul.f32 %v453, %v271
    %v558 = vmul.f32 %v454, %v272
    %v559 = vmul.f32 %v455, %v273
    %v560 = vmul.f32 %v456, %v274
    %v561 = vmul.f32 %v457, %v275
    %562 = vmatpush.xpose.msra.mxu0 %v561
    %563 = vmatpush.xpose.msra.mxu0 %v560
    %564 = vmatpush.xpose.msra.mxu0 %v559
    %565 = vmatpush.xpose.msra.mxu0 %v558
    %566 = vmatpush.xpose.msra.mxu0 %v557
    %567 = vmatpush.xpose.msra.mxu0 %v556
    %568 = vmatpush.xpose.msra.mxu0 %v555
    %569 = vmatpush.xpose.msra.mxu0 %v554
    %570 = vmatpush.xpose.msra.mxu0 %v553
    %571 = vmatpush.xpose.msra.mxu0 %v552
    %572 = vmatpush.xpose.msra.mxu0 %v551
    %573 = vmatpush.xpose.msra.mxu0 %v550
    %574 = vmatpush.xpose.msra.mxu0 %v549
    %575 = vmatpush.xpose.msra.mxu0 %v548
    %576 = vmatpush.xpose.msra.mxu0 %v547
    %577 = vmatpush.xpose.msra.mxu0 %v546
    %578 = vmatmul.f32.gmra.mxu0 1.0
    %v579 = vpop.f32.mrf.mxu0
    %v580 = vadd.f32 0.0, %v579
    %581 = vdwg.mxu0
    %vm582 = vcmp.eq.f32.partialorder %v524, 0.0
    %v583 = vsel %vm582, 1, 0
    %v584 = vcvt.s32.f32 %v583
    %v585 = vlog2.pop %v544
    %v586 = vmul.f32 %v585, 0.6931472
    %v587 = vmul.f32 %v524, %v586
    %v588 = vsub.f32 %v580, %v587
    %v589 = vadd.f32 %v524, %v584
    %v590 = vrcp.pop %v589
    %v591 = vmul.f32 %v589, %v590
    %v592 = vsub.f32 1.0, %v591
    %v593 = vmul.f32 %v590, %v592
    %v594 = vadd.f32 %v590, %v593
    %vm595 = vweird.f32 %v589
    %vm596 = vweird.f32 %v590
    %vm597 = vmor %vm595, %vm596
    %v598 = vsel %vm597, %v590, %v594
    %v599 = vand.u32 2147483647, %v589
    %vm600 = vcmp.eq.f32.partialorder %v599, 8.507059e+37
    %v601 = vand.u32 %v589, 2147483648
    %v602 = vor.u32 1.1754944e-38, %v601
    %v603 = vsel %vm600, %v602, %v598
    %v604 = vmul.f32 %v588, %v603
    %v605 = vsub.f32 0.0, %v604
    %v606 = vsub.f32 1.0, %v584
    %v607 = vmul.f32 %v605, %v606
    %v609 = vrot.slane %v584, 7
    %vm611 = vcmask 1040384
    %v612 = vsel %vm611, %v607, %v609
    %613 = vst [vmem:[#allocation2] sm:$0x3] %v612
    // Predicated region
    $region14: #{tpu_custom_call.1} parent=1 // pred_check
      _
    $region15: #{tpu_custom_call.1} parent=1 // pred_check_branch
      %615 = sbr.rel (0) target = $region17
    $region16: #{tpu_custom_call.1} parent=1 // pred_region
      %617 = vsyncadd [#allocation3], 0
      %s619 = sshll.u32 [#allocation2], 4
      %s620 = int_to_ptr.vmem [resolvable:$true] %s619
      %s621 = sshll.u32 %s3, 4
      %s622 = int_to_ptr.hbm [resolvable:$true] %s621
      %624 = dma.vmem_to_hbm [thread:$0]  %s620, 32, %s622, [#allocation3]
    $region17: #{tpu_custom_call.1} parent=1 // pred_fallthru
      _
    // Predicated region
    $region18: #{tpu_custom_call.1} parent=1 // pred_check
      _
    $region19: #{tpu_custom_call.1} parent=1 // pred_check_branch
      %626 = sbr.rel (0) target = $region21
    $region20: #{tpu_custom_call.1} parent=1 // pred_region
      %628 = dma.done [#allocation3], 32
    $region21: #{tpu_custom_call.1} parent=1 // pred_fallthru
      _
    %629 = vsyncpa [#allocation3], 1

</llo_original>
